<compile_context>
chip_gen: v5e
topology: v5e:2x2
jax: 0.10.0
libtpu: 0.0.40
codegen_flags: <defaults>
</compile_context>

<pallas_src>
import functools

import jax
import jax.numpy as jnp
from jax.experimental import pallas as pl
from jax.experimental.pallas import tpu as pltpu


def _round_up(a, b):
    return (a + b - 1) // b * b


def _vmem_capacity_bytes():
    """Physical VMEM per core; conservative 64 MiB fallback (v7x size)."""
    default = 64 * 1024 * 1024
    try:
        info = pltpu.get_tpu_info()
    except Exception:
        return default
    for attr in ("vmem_capacity_bytes", "vmem_size_bytes", "vmem_bytes"):
        val = getattr(info, attr, None)
        try:
            if val and int(val) > 0:
                return int(val)
        except (TypeError, ValueError):
            pass
    return default


# ---------------------------------------------------------------------------
# Masked two-branch log_softmax on a lane-padded (rows, 2*c_pad) slab (f32).
# Branch 1 occupies columns [0, nclass), branch 2 [c_pad, c_pad + nclass).
# ---------------------------------------------------------------------------
def _dual_log_softmax(z, nclass, c_pad):
    col = jax.lax.broadcasted_iota(jnp.int32, z.shape, 1)
    b1 = col < nclass
    b2 = (col >= c_pad) & (col < c_pad + nclass)
    neg = jnp.float32(-1e30)
    zm = jnp.where(b1 | b2, z, neg)
    m1 = jnp.max(jnp.where(b1, zm, neg), axis=-1, keepdims=True)
    m2 = jnp.max(jnp.where(b2, zm, neg), axis=-1, keepdims=True)
    m = jnp.where(col < c_pad, m1, m2)
    e = jnp.exp(zm - m)
    s1 = jnp.sum(jnp.where(b1, e, 0.0), axis=-1, keepdims=True)
    s2 = jnp.sum(jnp.where(b2, e, 0.0), axis=-1, keepdims=True)
    s = jnp.where(col < c_pad, s1, s2)
    return z - m - jnp.log(s)


# ---------------------------------------------------------------------------
# Fully fused kernel (adj resident in VMEM, read from HBM once).
#   out = [ log_softmax(A (ReLU(A X W1a + b1a)) W2a + b2a) |
#           log_softmax(A (ReLU(A X W1b + b1b)) W2b + b2b) ]
# ---------------------------------------------------------------------------
def _fused_kernel(adj_ref, x_ref, w1_ref, b1_ref, w2_ref, b2_ref, out_ref,
                  *, nclass, c_pad):
    bf = jnp.bfloat16
    xw = jnp.dot(x_ref[...], w1_ref[...],
                 preferred_element_type=jnp.float32).astype(bf)
    h = jnp.dot(adj_ref[...], xw, preferred_element_type=jnp.float32)
    h = jnp.maximum(h + b1_ref[...], 0.0).astype(bf)
    hw = jnp.dot(h, w2_ref[...], preferred_element_type=jnp.float32).astype(bf)
    z = jnp.dot(adj_ref[...], hw, preferred_element_type=jnp.float32) + b2_ref[...]
    out_ref[...] = _dual_log_softmax(z, nclass, c_pad)


# ---------------------------------------------------------------------------
# Streaming-path kernels (row-tiled adjacency strips).
# ---------------------------------------------------------------------------
def _transform_kernel(x_ref, w_ref, xw_ref):
    xw_ref[...] = jnp.dot(x_ref[...], w_ref[...],
                          preferred_element_type=jnp.float32).astype(xw_ref.dtype)


def _layer1_kernel(adj_ref, xw_ref, b1_ref, w2_ref, hw_ref):
    h = jnp.dot(adj_ref[...], xw_ref[...], preferred_element_type=jnp.float32)
    h = jnp.maximum(h + b1_ref[...], 0.0).astype(w2_ref.dtype)
    hw_ref[...] = jnp.dot(h, w2_ref[...],
                          preferred_element_type=jnp.float32).astype(hw_ref.dtype)


def _layer2_kernel(adj_ref, hw_ref, b2_ref, out_ref, *, nclass, c_pad):
    z = jnp.dot(adj_ref[...], hw_ref[...],
                preferred_element_type=jnp.float32) + b2_ref[...]
    out_ref[...] = _dual_log_softmax(z, nclass, c_pad)


# ---------------------------------------------------------------------------
# Glue: dense symmetrically-normalized adjacency, built at padded shape and
# cast to the streaming dtype exactly once.
# TODO(synk): a true sparse-gather GCN aggregation would need a manual DMA
#             gather kernel; the graph is densified before the kernels.
# ---------------------------------------------------------------------------
def build_normalized_adjacency(n, n_pad, edge_index, edge_weight,
                               dtype=jnp.bfloat16):
    adj = jnp.zeros((n_pad, n_pad), jnp.float32)
    adj = adj.at[edge_index[0], edge_index[1]].add(edge_weight.astype(jnp.float32))
    idx = jnp.arange(n)
    adj = adj.at[idx, idx].add(1.0)                      # self-loops (real nodes)
    deg = jnp.sum(adj, axis=1)
    d_inv_sqrt = jnp.where(deg > 0, jax.lax.rsqrt(deg), 0.0)
    adj = adj * d_inv_sqrt[:, None] * d_inv_sqrt[None, :]
    return adj.astype(dtype)


# ---------------------------------------------------------------------------
# Parameter packing: wide [W1a|W1b], block-diagonal W2, lane-padded to 128.
# ---------------------------------------------------------------------------
def _pack_weights(params, nfeat, nfeat_pad, nhid, h_pad, nclass, c_pad):
    w1 = jnp.zeros((nfeat_pad, 2 * h_pad), jnp.float32)
    w1 = w1.at[:nfeat, :nhid].set(params["w1_1"])
    w1 = w1.at[:nfeat, h_pad:h_pad + nhid].set(params["w1_2"])
    b1 = jnp.zeros((1, 2 * h_pad), jnp.float32)
    b1 = b1.at[:, :nhid].set(params["b1_1"])
    b1 = b1.at[:, h_pad:h_pad + nhid].set(params["b1_2"])
    w2 = jnp.zeros((2 * h_pad, 2 * c_pad), jnp.float32)
    w2 = w2.at[:nhid, :nclass].set(params["w2_1"])
    w2 = w2.at[h_pad:h_pad + nhid, c_pad:c_pad + nclass].set(params["w2_2"])
    b2 = jnp.zeros((1, 2 * c_pad), jnp.float32)
    b2 = b2.at[:, :nclass].set(params["b2_1"])
    b2 = b2.at[:, c_pad:c_pad + nclass].set(params["b2_2"])
    return (w1.astype(jnp.bfloat16), b1, w2.astype(jnp.bfloat16), b2)


def _pad_features(x, n, nfeat, n_pad, nfeat_pad):
    xp = jnp.zeros((n_pad, nfeat_pad), jnp.bfloat16)
    return xp.at[:n, :nfeat].set(x.astype(jnp.bfloat16))


# ---------------------------------------------------------------------------
# VMEM budgeting helpers
# ---------------------------------------------------------------------------
def _fused_vmem_estimate(n_pad, nfeat_pad, h_pad, c_pad):
    bf, f32 = 2, 4
    io = (n_pad * n_pad * bf                     # adj
          + n_pad * nfeat_pad * bf               # x
          + nfeat_pad * 2 * h_pad * bf           # W1cat
          + 2 * h_pad * 2 * c_pad * bf           # W2blk
          + (2 * h_pad + 2 * c_pad) * f32        # biases
          + n_pad * 2 * c_pad * f32)             # out
    tmp = n_pad * (2 * h_pad * (f32 + bf) + 2 * c_pad * (2 * f32 + bf))
    return 2 * io + tmp                          # 2x: pipeline double-buffers


def _pick_row_tile(n, nfeat_pad, h_pad, c_pad, budget, block_rows):
    n_base = max(_round_up(n, 128), 128)
    tm = min(max(block_rows // 128, 1) * 128, n_base)
    # Grid-invariant operands (counted double-buffered, conservatively).
    resident = 2 * 2 * n_base * max(2 * h_pad, 2 * c_pad)             # XW / HW
    resident += 2 * 2 * (nfeat_pad * 2 * h_pad + 2 * h_pad * 2 * c_pad)
    while tm > 128:
        per_step = 2 * (tm * n_base * 2          # adj strip (bf16, 2 buffers)
                        + tm * nfeat_pad * 2     # x strip
                        + tm * 2 * h_pad * 2     # xw strip
                        + tm * 2 * c_pad * 4)    # f32 out strip
        if resident + per_step <= budget:
            break
        tm -= 128
    n_pad = max(_round_up(n, tm), tm)
    return tm, n_pad


# ---------------------------------------------------------------------------
# Forward variants
# ---------------------------------------------------------------------------
def _forward_fused(x, edge_index, edge_weight, params, n, nfeat, nhid, nclass,
                   n_pad, nfeat_pad, h_pad, c_pad, vmem_limit):
    adj = build_normalized_adjacency(n, n_pad, edge_index, edge_weight)
    x_b = _pad_features(x, n, nfeat, n_pad, nfeat_pad)
    w1, b1, w2, b2 = _pack_weights(params, nfeat, nfeat_pad, nhid, h_pad,
                                   nclass, c_pad)
    full = lambda shape: pl.BlockSpec(shape, lambda i: (0, 0))

    out = pl.pallas_call(
        functools.partial(_fused_kernel, nclass=nclass, c_pad=c_pad),
        out_shape=jax.ShapeDtypeStruct((n_pad, 2 * c_pad), jnp.float32),
        grid=(1,),
        in_specs=[full((n_pad, n_pad)),
                  full((n_pad, nfeat_pad)),
                  full((nfeat_pad, 2 * h_pad)),
                  full((1, 2 * h_pad)),
                  full((2 * h_pad, 2 * c_pad)),
                  full((1, 2 * c_pad))],
        out_specs=full((n_pad, 2 * c_pad)),
        compiler_params=pltpu.CompilerParams(
            dimension_semantics=("arbitrary",),
            vmem_limit_bytes=vmem_limit),
    )(adj, x_b, w1, b1, w2, b2)

    return out[:n, :nclass], out[:n, c_pad:c_pad + nclass]


def _forward_streaming(x, edge_index, edge_weight, params, n, nfeat, nhid,
                       nclass, nfeat_pad, h_pad, c_pad, vmem_limit, budget,
                       block_rows):
    tm, n_pad = _pick_row_tile(n, nfeat_pad, h_pad, c_pad, budget, block_rows)
    grid = (n_pad // tm,)

    adj = build_normalized_adjacency(n, n_pad, edge_index, edge_weight)
    x_b = _pad_features(x, n, nfeat, n_pad, nfeat_pad)
    w1, b1, w2, b2 = _pack_weights(params, nfeat, nfeat_pad, nhid, h_pad,
                                   nclass, c_pad)

    cp = pltpu.CompilerParams(dimension_semantics=("parallel",),
                              vmem_limit_bytes=vmem_limit)
    row = lambda shape: pl.BlockSpec(shape, lambda i: (i, 0))
    full = lambda shape: pl.BlockSpec(shape, lambda i: (0, 0))

    # 1) XW = X @ [W1a | W1b]                                  (N, 2*h_pad) bf16
    xw = pl.pallas_call(
        _transform_kernel,
        out_shape=jax.ShapeDtypeStruct((n_pad, 2 * h_pad), jnp.bfloat16),
        grid=grid,
        in_specs=[row((tm, nfeat_pad)), full((nfeat_pad, 2 * h_pad))],
        out_specs=row((tm, 2 * h_pad)),
        compiler_params=cp,
    )(x_b, w1)

    # 2) HW = ReLU(A @ XW + b1) @ blockdiag(W2a, W2b)          (N, 2*c_pad) bf16
    hw = pl.pallas_call(
        _layer1_kernel,
        out_shape=jax.ShapeDtypeStruct((n_pad, 2 * c_pad), jnp.bfloat16),
        grid=grid,
        in_specs=[row((tm, n_pad)), full((n_pad, 2 * h_pad)),
                  full((1, 2 * h_pad)), full((2 * h_pad, 2 * c_pad))],
        out_specs=row((tm, 2 * c_pad)),
        compiler_params=cp,
    )(adj, xw, b1, w2)

    # 3) out = dual log_softmax(A @ HW + b2)                   (N, 2*c_pad) f32
    out = pl.pallas_call(
        functools.partial(_layer2_kernel, nclass=nclass, c_pad=c_pad),
        out_shape=jax.ShapeDtypeStruct((n_pad, 2 * c_pad), jnp.float32),
        grid=grid,
        in_specs=[row((tm, n_pad)), full((n_pad, 2 * c_pad)),
                  full((1, 2 * c_pad))],
        out_specs=row((tm, 2 * c_pad)),
        compiler_params=cp,
    )(adj, hw, b2)

    return out[:n, :nclass], out[:n, c_pad:c_pad + nclass]


def coteaching_forward(x, edge_index, edge_weight, params, *, block_rows=512,
                       force_streaming=False):
    n, nfeat = x.shape
    nhid = params["w1_1"].shape[1]
    nclass = params["w2_1"].shape[1]
    nfeat_pad = _round_up(nfeat, 128)
    h_pad = _round_up(nhid, 64)       # 2*h_pad is a multiple of 128 (lane-dense)
    c_pad = _round_up(nclass, 64)     # 2*c_pad is a multiple of 128 (lane-dense)

    cap = _vmem_capacity_bytes()
    vmem_limit = int(cap * 0.9)
    budget = int(cap * 0.6)

    n_pad_fused = max(_round_up(n, 128), 128)
    if (not force_streaming
            and _fused_vmem_estimate(n_pad_fused, nfeat_pad, h_pad, c_pad) <= budget):
        return _forward_fused(x, edge_index, edge_weight, params, n, nfeat,
                              nhid, nclass, n_pad_fused, nfeat_pad, h_pad,
                              c_pad, vmem_limit)
    return _forward_streaming(x, edge_index, edge_weight, params, n, nfeat,
                              nhid, nclass, nfeat_pad, h_pad, c_pad,
                              vmem_limit, budget, block_rows)


# ---------------------------------------------------------------------------
# Pure-JAX f32 reference (numerical check)
# ---------------------------------------------------------------------------
def coteaching_reference(x, edge_index, edge_weight, params):
    n = x.shape[0]
    adj = build_normalized_adjacency(n, n, edge_index, edge_weight,
                                     dtype=jnp.float32)

    def gcn(w1, b1, w2, b2):
        h = jnp.maximum(adj @ (x @ w1) + b1, 0.0)
        z = adj @ (h @ w2) + b2
        m = jnp.max(z, axis=-1, keepdims=True)
        zs = z - m
        return zs - jnp.log(jnp.sum(jnp.exp(zs), axis=-1, keepdims=True))

    return (gcn(params["w1_1"], params["b1_1"], params["w2_1"], params["b2_1"]),
            gcn(params["w1_2"], params["b1_2"], params["w2_2"], params["b2_2"]))


# ---------------------------------------------------------------------------
# Deterministic parameter init (Glorot-uniform-like, matching GCN layer shapes)
# ---------------------------------------------------------------------------
def init_params(key, nfeat, nhid, nclass):
    ks = jax.random.split(key, 4)

    def glorot(k, fan_in, fan_out):
        lim = jnp.sqrt(6.0 / (fan_in + fan_out))
        return jax.random.uniform(k, (fan_in, fan_out), jnp.float32, -lim, lim)

    return {
        "w1_1": glorot(ks[0], nfeat, nhid), "b1_1": jnp.zeros((1, nhid), jnp.float32),
        "w2_1": glorot(ks[1], nhid, nclass), "b2_1": jnp.zeros((1, nclass), jnp.float32),
        "w1_2": glorot(ks[2], nfeat, nhid), "b1_2": jnp.zeros((1, nhid), jnp.float32),
        "w2_2": glorot(ks[3], nhid, nclass), "b2_2": jnp.zeros((1, nclass), jnp.float32),
    }


if __name__ == "__main__":
    key = jax.random.PRNGKey(0)
    (k_x, k_e, k_w, k_p, k_x2, k_e2, k_w2, k_p2) = jax.random.split(key, 8)

    # ---- test 1: small graph -> fully fused single-kernel path ------------
    N, NFEAT, NHID, NCLASS, NEDGE = 64, 32, 16, 8, 128
    x = jax.random.normal(k_x, (N, NFEAT), jnp.float32)
    edge_index = jax.random.randint(k_e, (2, NEDGE), 0, N, jnp.int32)
    edge_weight = jax.random.uniform(k_w, (NEDGE,), jnp.float32, 0.5, 1.5)
    params = init_params(k_p, NFEAT, NHID, NCLASS)

    out1, out2 = coteaching_forward(x, edge_index, edge_weight, params)
    jax.block_until_ready((out1, out2))

    assert out1.shape == (N, NCLASS) and out2.shape == (N, NCLASS)
    assert jnp.allclose(jnp.sum(jnp.exp(out1), axis=-1), 1.0, atol=1e-4)
    assert jnp.allclose(jnp.sum(jnp.exp(out2), axis=-1), 1.0, atol=1e-4)
    ref1, ref2 = coteaching_reference(x, edge_index, edge_weight, params)
    assert jnp.max(jnp.abs(out1 - ref1)) < 0.2
    assert jnp.max(jnp.abs(out2 - ref2)) < 0.2

    # ---- test 2: force the row-streamed path (awkward, non-aligned shapes) -
    N2, NFEAT2, NHID2, NCLASS2, NEDGE2 = 300, 48, 20, 7, 900
    x2 = jax.random.normal(k_x2, (N2, NFEAT2), jnp.float32)
    edge_index2 = jax.random.randint(k_e2, (2, NEDGE2), 0, N2, jnp.int32)
    edge_weight2 = jax.random.uniform(k_w2, (NEDGE2,), jnp.float32, 0.5, 1.5)
    params2 = init_params(k_p2, NFEAT2, NHID2, NCLASS2)

    o1, o2 = coteaching_forward(x2, edge_index2, edge_weight2, params2,
                                block_rows=128, force_streaming=True)
    jax.block_until_ready((o1, o2))

    assert o1.shape == (N2, NCLASS2) and o2.shape == (N2, NCLASS2)
    assert jnp.allclose(jnp.sum(jnp.exp(o1), axis=-1), 1.0, atol=1e-4)
    assert jnp.allclose(jnp.sum(jnp.exp(o2), axis=-1), 1.0, atol=1e-4)
    r1, r2 = coteaching_reference(x2, edge_index2, edge_weight2, params2)
    assert jnp.max(jnp.abs(o1 - r1)) < 0.35
    assert jnp.max(jnp.abs(o2 - r2)) < 0.35

    print("KERNEL_OK")
</pallas_src>

<mosaic_0001>
module attributes {stable_mosaic.version = 11 : i64} {
  func.func @_fused_kernel(%arg0: i32, %arg1: memref<128x128xbf16, #tpu.memory_space<vmem>>, %arg2: memref<128x128xbf16, #tpu.memory_space<vmem>>, %arg3: memref<128x128xbf16, #tpu.memory_space<vmem>>, %arg4: memref<1x128xf32, #tpu.memory_space<vmem>>, %arg5: memref<128x128xbf16, #tpu.memory_space<vmem>>, %arg6: memref<1x128xf32, #tpu.memory_space<vmem>>, %arg7: memref<128x128xf32, #tpu.memory_space<vmem>>) attributes {dimension_semantics = [#tpu.dimension_semantics<arbitrary>], iteration_bounds = array<i64: 1>, scalar_prefetch = 0 : i64, scratch_operands = 0 : i64, tpu.core_type = #tpu.core_type<tc>, window_params = [{pipeline_mode = #tpu.pipeline_mode<synchronous>, transform_indices = @transform_0, window_bounds = array<i64: 128, 128>}, {pipeline_mode = #tpu.pipeline_mode<synchronous>, transform_indices = @transform_1, window_bounds = array<i64: 128, 128>}, {pipeline_mode = #tpu.pipeline_mode<synchronous>, transform_indices = @transform_2, window_bounds = array<i64: 128, 128>}, {pipeline_mode = #tpu.pipeline_mode<synchronous>, transform_indices = @transform_3, window_bounds = array<i64: 1, 128>}, {pipeline_mode = #tpu.pipeline_mode<synchronous>, transform_indices = @transform_4, window_bounds = array<i64: 128, 128>}, {pipeline_mode = #tpu.pipeline_mode<synchronous>, transform_indices = @transform_5, window_bounds = array<i64: 1, 128>}, {pipeline_mode = #tpu.pipeline_mode<synchronous>, transform_indices = @transform_6, window_bounds = array<i64: 128, 128>}]} {
    %c0 = arith.constant 0 : index
    %c0_0 = arith.constant 0 : index
    %0 = vector.load %arg2[%c0, %c0_0] : memref<128x128xbf16, #tpu.memory_space<vmem>>, vector<128x128xbf16>
    %c0_1 = arith.constant 0 : index
    %c0_2 = arith.constant 0 : index
    %1 = vector.load %arg3[%c0_1, %c0_2] : memref<128x128xbf16, #tpu.memory_space<vmem>>, vector<128x128xbf16>
    %cst = arith.constant dense<0.000000e+00> : vector<128x128xf32>
    %2 = tpu.matmul %0, %1, %cst {dimension_numbers = #tpu.dot_dimension_numbers<[1], [0], [0], [1], [0, 0, 1, 1], [], []>} : vector<128x128xbf16>, vector<128x128xbf16>, vector<128x128xf32> -> vector<128x128xf32>
    %3 = arith.truncf %2 : vector<128x128xf32> to vector<128x128xbf16>
    %c0_3 = arith.constant 0 : index
    %c0_4 = arith.constant 0 : index
    %4 = vector.load %arg1[%c0_3, %c0_4] : memref<128x128xbf16, #tpu.memory_space<vmem>>, vector<128x128xbf16>
    %cst_5 = arith.constant dense<0.000000e+00> : vector<128x128xf32>
    %5 = tpu.matmul %4, %3, %cst_5 {dimension_numbers = #tpu.dot_dimension_numbers<[1], [0], [0], [1], [0, 0, 1, 1], [], []>} : vector<128x128xbf16>, vector<128x128xbf16>, vector<128x128xf32> -> vector<128x128xf32>
    %c0_6 = arith.constant 0 : index
    %c0_7 = arith.constant 0 : index
    %6 = vector.load %arg4[%c0_6, %c0_7] : memref<1x128xf32, #tpu.memory_space<vmem>>, vector<1x128xf32>
    %7 = vector.broadcast %6 : vector<1x128xf32> to vector<128x128xf32>
    %8 = arith.addf %5, %7 : vector<128x128xf32>
    %cst_8 = arith.constant 0.000000e+00 : f32
    %9 = vector.broadcast %cst_8 : f32 to vector<128x128xf32>
    %10 = arith.maximumf %8, %9 : vector<128x128xf32>
    %11 = arith.truncf %10 : vector<128x128xf32> to vector<128x128xbf16>
    %c0_9 = arith.constant 0 : index
    %c0_10 = arith.constant 0 : index
    %12 = vector.load %arg5[%c0_9, %c0_10] : memref<128x128xbf16, #tpu.memory_space<vmem>>, vector<128x128xbf16>
    %cst_11 = arith.constant dense<0.000000e+00> : vector<128x128xf32>
    %13 = tpu.matmul %11, %12, %cst_11 {dimension_numbers = #tpu.dot_dimension_numbers<[1], [0], [0], [1], [0, 0, 1, 1], [], []>} : vector<128x128xbf16>, vector<128x128xbf16>, vector<128x128xf32> -> vector<128x128xf32>
    %14 = arith.truncf %13 : vector<128x128xf32> to vector<128x128xbf16>
    %c0_12 = arith.constant 0 : index
    %c0_13 = arith.constant 0 : index
    %15 = vector.load %arg1[%c0_12, %c0_13] : memref<128x128xbf16, #tpu.memory_space<vmem>>, vector<128x128xbf16>
    %cst_14 = arith.constant dense<0.000000e+00> : vector<128x128xf32>
    %16 = tpu.matmul %15, %14, %cst_14 {dimension_numbers = #tpu.dot_dimension_numbers<[1], [0], [0], [1], [0, 0, 1, 1], [], []>} : vector<128x128xbf16>, vector<128x128xbf16>, vector<128x128xf32> -> vector<128x128xf32>
    %c0_15 = arith.constant 0 : index
    %c0_16 = arith.constant 0 : index
    %17 = vector.load %arg6[%c0_15, %c0_16] : memref<1x128xf32, #tpu.memory_space<vmem>>, vector<1x128xf32>
    %18 = vector.broadcast %17 : vector<1x128xf32> to vector<128x128xf32>
    %19 = arith.addf %16, %18 : vector<128x128xf32>
    %20 = tpu.iota {dimensions = array<i32: 1>} : vector<128x128xi32>
    %c8_i32 = arith.constant 8 : i32
    %21 = vector.broadcast %c8_i32 : i32 to vector<128x128xi32>
    %22 = arith.cmpi slt, %20, %21 : vector<128x128xi32>
    %c64_i32 = arith.constant 64 : i32
    %23 = vector.broadcast %c64_i32 : i32 to vector<128x128xi32>
    %24 = arith.cmpi sge, %20, %23 : vector<128x128xi32>
    %c72_i32 = arith.constant 72 : i32
    %25 = vector.broadcast %c72_i32 : i32 to vector<128x128xi32>
    %26 = arith.cmpi slt, %20, %25 : vector<128x128xi32>
    %27 = arith.andi %24, %26 : vector<128x128xi1>
    %28 = arith.ori %22, %27 : vector<128x128xi1>
    %cst_17 = arith.constant -1.000000e+30 : f32
    %29 = vector.broadcast %cst_17 : f32 to vector<128x128xf32>
    %30 = arith.select %28, %19, %29 : vector<128x128xi1>, vector<128x128xf32>
    %cst_18 = arith.constant -1.000000e+30 : f32
    %31 = vector.broadcast %cst_18 : f32 to vector<128x128xf32>
    %32 = arith.select %22, %30, %31 : vector<128x128xi1>, vector<128x128xf32>
    %cst_19 = arith.constant dense<0xFF800000> : vector<128xf32>
    %33 = vector.multi_reduction <maximumf>, %32, %cst_19 [1] : vector<128x128xf32> to vector<128xf32>
    %34 = vector.shape_cast %33 : vector<128xf32> to vector<128x1xf32>
    %cst_20 = arith.constant -1.000000e+30 : f32
    %35 = vector.broadcast %cst_20 : f32 to vector<128x128xf32>
    %36 = arith.select %27, %30, %35 : vector<128x128xi1>, vector<128x128xf32>
    %cst_21 = arith.constant dense<0xFF800000> : vector<128xf32>
    %37 = vector.multi_reduction <maximumf>, %36, %cst_21 [1] : vector<128x128xf32> to vector<128xf32>
    %38 = vector.shape_cast %37 : vector<128xf32> to vector<128x1xf32>
    %c64_i32_22 = arith.constant 64 : i32
    %39 = vector.broadcast %c64_i32_22 : i32 to vector<128x128xi32>
    %40 = arith.cmpi slt, %20, %39 : vector<128x128xi32>
    %41 = vector.shape_cast %34 : vector<128x1xf32> to vector<128x1xf32>
    %42 = vector.broadcast %41 : vector<128x1xf32> to vector<128x128xf32>
    %43 = vector.shape_cast %38 : vector<128x1xf32> to vector<128x1xf32>
    %44 = vector.broadcast %43 : vector<128x1xf32> to vector<128x128xf32>
    %45 = arith.select %40, %42, %44 : vector<128x128xi1>, vector<128x128xf32>
    %46 = arith.subf %30, %45 : vector<128x128xf32>
    %47 = math.exp %46 : vector<128x128xf32>
    %cst_23 = arith.constant 0.000000e+00 : f32
    %48 = vector.broadcast %cst_23 : f32 to vector<128x128xf32>
    %49 = arith.select %22, %47, %48 : vector<128x128xi1>, vector<128x128xf32>
    %cst_24 = arith.constant dense<0.000000e+00> : vector<128xf32>
    %50 = vector.multi_reduction <add>, %49, %cst_24 [1] : vector<128x128xf32> to vector<128xf32>
    %51 = vector.shape_cast %50 : vector<128xf32> to vector<128x1xf32>
    %cst_25 = arith.constant 0.000000e+00 : f32
    %52 = vector.broadcast %cst_25 : f32 to vector<128x128xf32>
    %53 = arith.select %27, %47, %52 : vector<128x128xi1>, vector<128x128xf32>
    %cst_26 = arith.constant dense<0.000000e+00> : vector<128xf32>
    %54 = vector.multi_reduction <add>, %53, %cst_26 [1] : vector<128x128xf32> to vector<128xf32>
    %55 = vector.shape_cast %54 : vector<128xf32> to vector<128x1xf32>
    %c64_i32_27 = arith.constant 64 : i32
    %56 = vector.broadcast %c64_i32_27 : i32 to vector<128x128xi32>
    %57 = arith.cmpi slt, %20, %56 : vector<128x128xi32>
    %58 = vector.shape_cast %51 : vector<128x1xf32> to vector<128x1xf32>
    %59 = vector.broadcast %58 : vector<128x1xf32> to vector<128x128xf32>
    %60 = vector.shape_cast %55 : vector<128x1xf32> to vector<128x1xf32>
    %61 = vector.broadcast %60 : vector<128x1xf32> to vector<128x128xf32>
    %62 = arith.select %57, %59, %61 : vector<128x128xi1>, vector<128x128xf32>
    %63 = arith.subf %19, %45 : vector<128x128xf32>
    %64 = math.log %62 : vector<128x128xf32>
    %65 = arith.subf %63, %64 : vector<128x128xf32>
    %c0_28 = arith.constant 0 : index
    %c0_29 = arith.constant 0 : index
    %66 = vector.load %arg7[%c0_28, %c0_29] : memref<128x128xf32, #tpu.memory_space<vmem>>, vector<128x128xf32>
    tpu.vector_store %arg7[%c0_28, %c0_29], %65 {strides = array<i32>} : memref<128x128xf32, #tpu.memory_space<vmem>>, vector<128x128xf32>,
    return
  }
  func.func @transform_0(%arg0: i32) -> (i32, i32) {
    %c0_i32 = arith.constant 0 : i32
    %c0_i32_0 = arith.constant 0 : i32
    %c0_i32_1 = arith.constant 0 : i32
    return %c0_i32, %c0_i32_0 : i32, i32
  }
  func.func @transform_1(%arg0: i32) -> (i32, i32) {
    %c0_i32 = arith.constant 0 : i32
    %c0_i32_0 = arith.constant 0 : i32
    %c0_i32_1 = arith.constant 0 : i32
    return %c0_i32, %c0_i32_0 : i32, i32
  }
  func.func @transform_2(%arg0: i32) -> (i32, i32) {
    %c0_i32 = arith.constant 0 : i32
    %c0_i32_0 = arith.constant 0 : i32
    %c0_i32_1 = arith.constant 0 : i32
    return %c0_i32, %c0_i32_0 : i32, i32
  }
  func.func @transform_3(%arg0: i32) -> (i32, i32) {
    %c0_i32 = arith.constant 0 : i32
    %c0_i32_0 = arith.constant 0 : i32
    %c0_i32_1 = arith.constant 0 : i32
    return %c0_i32, %c0_i32_0 : i32, i32
  }
  func.func @transform_4(%arg0: i32) -> (i32, i32) {
    %c0_i32 = arith.constant 0 : i32
    %c0_i32_0 = arith.constant 0 : i32
    %c0_i32_1 = arith.constant 0 : i32
    return %c0_i32, %c0_i32_0 : i32, i32
  }
  func.func @transform_5(%arg0: i32) -> (i32, i32) {
    %c0_i32 = arith.constant 0 : i32
    %c0_i32_0 = arith.constant 0 : i32
    %c0_i32_1 = arith.constant 0 : i32
    return %c0_i32, %c0_i32_0 : i32, i32
  }
  func.func @transform_6(%arg0: i32) -> (i32, i32) {
    %c0_i32 = arith.constant 0 : i32
    %c0_i32_0 = arith.constant 0 : i32
    %c0_i32_1 = arith.constant 0 : i32
    return %c0_i32, %c0_i32_0 : i32, i32
  }
}

</mosaic_0001>

<llo_original>
// kernel: tpu_custom_call.1
$region0: #{tpu_custom_call.1}
  #allocation0 [shape = 'u32[]', space=smem, size = 0x4, offset = 0x4, fixed_abs, tag = 'smem constant byte address 0x4 - core index']
  #allocation1 [shape = 'u32[72,128]{1,0:T(1,128)}', space=vmem, size = 0x9000, scoped, tag = 'internal scratch']
  %s0 = inlined_call_operand.hbm [shape: bf16[128,128], index: 0, kind: input, shape index: {}]
  %s1 = inlined_call_operand.hbm [shape: bf16[128,128], index: 1, kind: input, shape index: {}]
  %s2 = inlined_call_operand.hbm [shape: bf16[128,128], index: 2, kind: input, shape index: {}]
  %s3 = inlined_call_operand.vmem [shape: f32[1,128], index: 3, kind: input, shape index: {}]
  %s4 = inlined_call_operand.hbm [shape: bf16[128,128], index: 4, kind: input, shape index: {}]
  %s5 = inlined_call_operand.vmem [shape: f32[1,128], index: 5, kind: input, shape index: {}]
  %s6 = inlined_call_operand.hbm [shape: f32[128,128], index: 6, kind: output, shape index: {}]
  %s7 = sld [smem:[#allocation0]]
  $region50: #{tpu_custom_call.1} parent=0
    _
  %s9 = ssub.s32 1, %s7
  %s10 = scalar_select 0, %s9, %s7
  $region1: #{tpu_custom_call.1} parent=0
    #allocation2 [shape = 'u8[32768]{0}', space=vmem, size = 0x8000, scoped, tag = 'input window, operand 0, single buffered']
    #allocation3 [shape = 's32[1]{0}', space=sflag, size = 0x4, scoped, tag = 'scoped memory for tpu_custom_call.1']
    #allocation4 [shape = 's32[1]{0}', space=sflag, size = 0x4, scoped, tag = 'scoped memory for tpu_custom_call.1']
    #allocation5 [shape = 'u8[32768]{0}', space=vmem, size = 0x8000, scoped, tag = 'input window, operand 1, single buffered']
    #allocation6 [shape = 's32[1]{0}', space=sflag, size = 0x4, scoped, tag = 'scoped memory for tpu_custom_call.1']
    #allocation7 [shape = 'u8[32768]{0}', space=vmem, size = 0x8000, scoped, tag = 'input window, operand 2, single buffered']
    #allocation8 [shape = 'u8[32768]{0}', space=vmem, size = 0x8000, scoped, tag = 'input window, operand 4, single buffered']
    #allocation9 [shape = 's32[1]{0}', space=sflag, size = 0x4, scoped, tag = 'scoped memory for tpu_custom_call.1']
    #allocation10 [shape = 'u8[65536]{0}', space=vmem, size = 0x10000, scoped, tag = 'output window, operand 0, single buffered']
    %11 = vsyncpa [#allocation3], 0
    %12 = vsyncpa [#allocation6], 0
    %13 = vsyncpa [#allocation9], 0
    %14 = vsyncpa [#allocation4], 0
    // Predicated region
    $region2: #{tpu_custom_call.1} parent=1 // pred_check
      _
    $region3: #{tpu_custom_call.1} parent=1 // pred_check_branch
      %16 = sbr.rel (0) target = $region5
    $region4: #{tpu_custom_call.1} parent=1 // pred_region
      %18 = vsyncadd [#allocation3], 0
      %s19 = sshll.u32 %s0, 4
      %s20 = int_to_ptr.hbm [resolvable:$true] %s19
      %s21 = sshll.u32 [#allocation2], 4
      %s22 = int_to_ptr.vmem [resolvable:$true] %s21
      %27 = dma.hbm_to_vmem [thread:$0]  %s20, 1024, %s22, [#allocation3], 64, 64, 4
    $region5: #{tpu_custom_call.1} parent=1 // pred_fallthru
      _
    // Predicated region
    $region6: #{tpu_custom_call.1} parent=1 // pred_check
      _
    $region7: #{tpu_custom_call.1} parent=1 // pred_check_branch
      %29 = sbr.rel (0) target = $region9
    $region8: #{tpu_custom_call.1} parent=1 // pred_region
      %31 = vsyncadd [#allocation6], 0
      %s32 = sshll.u32 %s1, 4
      %s33 = int_to_ptr.hbm [resolvable:$true] %s32
      %s34 = sshll.u32 [#allocation5], 4
      %s35 = int_to_ptr.vmem [resolvable:$true] %s34
      %40 = dma.hbm_to_vmem [thread:$0]  %s33, 1024, %s35, [#allocation6], 64, 64, 4
    $region9: #{tpu_custom_call.1} parent=1 // pred_fallthru
      _
    // Predicated region
    $region10: #{tpu_custom_call.1} parent=1 // pred_check
      _
    $region11: #{tpu_custom_call.1} parent=1 // pred_check_branch
      %42 = sbr.rel (0) target = $region13
    $region12: #{tpu_custom_call.1} parent=1 // pred_region
      %44 = vsyncadd [#allocation6], 0
      %s45 = sshll.u32 %s2, 4
      %s46 = int_to_ptr.hbm [resolvable:$true] %s45
      %s47 = sshll.u32 [#allocation7], 4
      %s48 = int_to_ptr.vmem [resolvable:$true] %s47
      %53 = dma.hbm_to_vmem [thread:$0]  %s46, 1024, %s48, [#allocation6], 64, 64, 4
    $region13: #{tpu_custom_call.1} parent=1 // pred_fallthru
      _
    // Predicated region
    $region14: #{tpu_custom_call.1} parent=1 // pred_check
      _
    $region15: #{tpu_custom_call.1} parent=1 // pred_check_branch
      %55 = sbr.rel (0) target = $region17
    $region16: #{tpu_custom_call.1} parent=1 // pred_region
      _
    $region17: #{tpu_custom_call.1} parent=1 // pred_fallthru
      _
    // Predicated region
    $region18: #{tpu_custom_call.1} parent=1 // pred_check
      _
    $region19: #{tpu_custom_call.1} parent=1 // pred_check_branch
      %57 = sbr.rel (0) target = $region21
    $region20: #{tpu_custom_call.1} parent=1 // pred_region
      %59 = vsyncadd [#allocation9], 0
      %s60 = sshll.u32 %s4, 4
      %s61 = int_to_ptr.hbm [resolvable:$true] %s60
      %s62 = sshll.u32 [#allocation8], 4
      %s63 = int_to_ptr.vmem [resolvable:$true] %s62
      %68 = dma.hbm_to_vmem [thread:$0]  %s61, 1024, %s63, [#allocation9], 64, 64, 4
    $region21: #{tpu_custom_call.1} parent=1 // pred_fallthru
      _
    // Predicated region
    $region22: #{tpu_custom_call.1} parent=1 // pred_check
      _
    $region23: #{tpu_custom_call.1} parent=1 // pred_check_branch
      %70 = sbr.rel (0) target = $region25
    $region24: #{tpu_custom_call.1} parent=1 // pred_region
      _
    $region25: #{tpu_custom_call.1} parent=1 // pred_fallthru
      _
    // Predicated region
    $region26: #{tpu_custom_call.1} parent=1 // pred_check
      _
    $region27: #{tpu_custom_call.1} parent=1 // pred_check_branch
      %72 = sbr.rel (0) target = $region29
    $region28: #{tpu_custom_call.1} parent=1 // pred_region
      %74 = dma.done [#allocation3], 1024
    $region29: #{tpu_custom_call.1} parent=1 // pred_fallthru
      _
    // Predicated region
    $region30: #{tpu_custom_call.1} parent=1 // pred_check
      _
    $region31: #{tpu_custom_call.1} parent=1 // pred_check_branch
      %76 = sbr.rel (0) target = $region33
    $region32: #{tpu_custom_call.1} parent=1 // pred_region
      %78 = dma.done [#allocation6], 1024
    $region33: #{tpu_custom_call.1} parent=1 // pred_fallthru
      _
    // Predicated region
    $region34: #{tpu_custom_call.1} parent=1 // pred_check
      _
    $region35: #{tpu_custom_call.1} parent=1 // pred_check_branch
      %80 = sbr.rel (0) target = $region37
    $region36: #{tpu_custom_call.1} parent=1 // pred_region
      %82 = dma.done [#allocation6], 1024
    $region37: #{tpu_custom_call.1} parent=1 // pred_fallthru
      _
    // Predicated region
    $region38: #{tpu_custom_call.1} parent=1 // pred_check
      _
    $region39: #{tpu_custom_call.1} parent=1 // pred_check_branch
      %84 = sbr.rel (0) target = $region41
    $region40: #{tpu_custom_call.1} parent=1 // pred_region
      %86 = dma.done [#allocation9], 1024
    $region41: #{tpu_custom_call.1} parent=1 // pred_fallthru
      _
    %v87 = vld [vmem:[#allocation5] sm:$0xf]
    %v88 = vld [vmem:[#allocation5 + $0x4] sm:$0xf]
    %v89 = vld [vmem:[#allocation5 + $0x8] sm:$0xf]
    %v90 = vld [vmem:[#allocation5 + $0xc] sm:$0xf]
    %v91 = vld [vmem:[#allocation5 + $0x10] sm:$0xf]
    %v92 = vld [vmem:[#allocation5 + $0x14] sm:$0xf]
    %v93 = vld [vmem:[#allocation5 + $0x18] sm:$0xf]
    %v94 = vld [vmem:[#allocation5 + $0x1c] sm:$0xf]
    %v95 = vld [vmem:[#allocation5 + $0x20] sm:$0xf]
    %v96 = vld [vmem:[#allocation5 + $0x24] sm:$0xf]
    %v97 = vld [vmem:[#allocation5 + $0x28] sm:$0xf]
    %v98 = vld [vmem:[#allocation5 + $0x2c] sm:$0xf]
    %v99 = vld [vmem:[#allocation5 + $0x30] sm:$0xf]
    %v100 = vld [vmem:[#allocation5 + $0x34] sm:$0xf]
    %v101 = vld [vmem:[#allocation5 + $0x38] sm:$0xf]
    %v102 = vld [vmem:[#allocation5 + $0x3c] sm:$0xf]
    %v103 = vld [vmem:[#allocation7] sm:$0xf]
    %v104 = vld [vmem:[#allocation7 + $0x4] sm:$0xf]
    %v105 = vld [vmem:[#allocation7 + $0x8] sm:$0xf]
    %v106 = vld [vmem:[#allocation7 + $0xc] sm:$0xf]
    %v107 = vld [vmem:[#allocation7 + $0x10] sm:$0xf]
    %v108 = vld [vmem:[#allocation7 + $0x14] sm:$0xf]
    %v109 = vld [vmem:[#allocation7 + $0x18] sm:$0xf]
    %v110 = vld [vmem:[#allocation7 + $0x1c] sm:$0xf]
    %v111 = vld [vmem:[#allocation7 + $0x20] sm:$0xf]
    %v112 = vld [vmem:[#allocation7 + $0x24] sm:$0xf]
    %v113 = vld [vmem:[#allocation7 + $0x28] sm:$0xf]
    %v114 = vld [vmem:[#allocation7 + $0x2c] sm:$0xf]
    %v115 = vld [vmem:[#allocation7 + $0x30] sm:$0xf]
    %v116 = vld [vmem:[#allocation7 + $0x34] sm:$0xf]
    %v117 = vld [vmem:[#allocation7 + $0x38] sm:$0xf]
    %v118 = vld [vmem:[#allocation7 + $0x3c] sm:$0xf]
    %v135 = vunpack.c.l.b16 %v87
    %v136 = vunpack.c.l.b16 %v88
    %v137 = vunpack.c.l.b16 %v89
    %v138 = vunpack.c.l.b16 %v90
    %v139 = vunpack.c.l.b16 %v91
    %v140 = vunpack.c.l.b16 %v92
    %v141 = vunpack.c.l.b16 %v93
    %v142 = vunpack.c.l.b16 %v94
    %v143 = vunpack.c.l.b16 %v95
    %v144 = vunpack.c.l.b16 %v96
    %v145 = vunpack.c.l.b16 %v97
    %v146 = vunpack.c.l.b16 %v98
    %v147 = vunpack.c.l.b16 %v99
    %v148 = vunpack.c.l.b16 %v100
    %v149 = vunpack.c.l.b16 %v101
    %v150 = vunpack.c.l.b16 %v102
    %v151 = vpack.c.b16 %v136, %v135
    %v152 = vpack.c.b16 %v138, %v137
    %v153 = vpack.c.b16 %v140, %v139
    %v154 = vpack.c.b16 %v142, %v141
    %v155 = vpack.c.b16 %v144, %v143
    %v156 = vpack.c.b16 %v146, %v145
    %v157 = vpack.c.b16 %v148, %v147
    %v158 = vpack.c.b16 %v150, %v149
    %v183 = vunpack.c.l.b16 %v103
    %v184 = vunpack.c.l.b16 %v104
    %v185 = vunpack.c.l.b16 %v105
    %v186 = vunpack.c.l.b16 %v106
    %v187 = vunpack.c.l.b16 %v107
    %v188 = vunpack.c.l.b16 %v108
    %v189 = vunpack.c.l.b16 %v109
    %v190 = vunpack.c.l.b16 %v110
    %v191 = vunpack.c.l.b16 %v111
    %v192 = vunpack.c.l.b16 %v112
    %v193 = vunpack.c.l.b16 %v113
    %v194 = vunpack.c.l.b16 %v114
    %v195 = vunpack.c.l.b16 %v115
    %v196 = vunpack.c.l.b16 %v116
    %v197 = vunpack.c.l.b16 %v117
    %v198 = vunpack.c.l.b16 %v118
    %v199 = vpack.c.b16 %v184, %v183
    %v200 = vpack.c.b16 %v186, %v185
    %v201 = vpack.c.b16 %v188, %v187
    %v202 = vpack.c.b16 %v190, %v189
    %v203 = vpack.c.b16 %v192, %v191
    %v204 = vpack.c.b16 %v194, %v193
    %v205 = vpack.c.b16 %v196, %v195
    %v206 = vpack.c.b16 %v198, %v197
    %215 = vmatpush.bf16.msra.mxu0 %v206
    %216 = vmatpush.bf16.msra.mxu0 %v205
    %217 = vmatpush.bf16.msra.mxu0 %v204
    %218 = vmatpush.bf16.msra.mxu0 %v203
    %219 = vmatpush.bf16.msra.mxu0 %v202
    %220 = vmatpush.bf16.msra.mxu0 %v201
    %221 = vmatpush.bf16.msra.mxu0 %v200
    %222 = vmatpush.bf16.msra.mxu0 %v199
    %223 = vmatmul.bf16.gmra.mxu0 %v151
    %v224 = vpop.f32.mrf.mxu0
    %v225 = vadd.f32 0.0, %v224
    %v226 = vpop.f32.mrf.mxu0
    %v227 = vadd.f32 0.0, %v226
    %228 = vmatmul.bf16.gmra.mxu0 %v152
    %v229 = vpop.f32.mrf.mxu0
    %v230 = vadd.f32 0.0, %v229
    %v231 = vpop.f32.mrf.mxu0
    %v232 = vadd.f32 0.0, %v231
    %233 = vmatmul.bf16.gmra.mxu0 %v153
    %v234 = vpop.f32.mrf.mxu0
    %v235 = vadd.f32 0.0, %v234
    %v236 = vpop.f32.mrf.mxu0
    %v237 = vadd.f32 0.0, %v236
    %238 = vmatmul.bf16.gmra.mxu0 %v154
    %v239 = vpop.f32.mrf.mxu0
    %v240 = vadd.f32 0.0, %v239
    %v241 = vpop.f32.mrf.mxu0
    %v242 = vadd.f32 0.0, %v241
    %243 = vmatmul.bf16.gmra.mxu0 %v155
    %v244 = vpop.f32.mrf.mxu0
    %v245 = vadd.f32 0.0, %v244
    %v246 = vpop.f32.mrf.mxu0
    %v247 = vadd.f32 0.0, %v246
    %248 = vmatmul.bf16.gmra.mxu0 %v156
    %v249 = vpop.f32.mrf.mxu0
    %v250 = vadd.f32 0.0, %v249
    %v251 = vpop.f32.mrf.mxu0
    %v252 = vadd.f32 0.0, %v251
    %253 = vmatmul.bf16.gmra.mxu0 %v157
    %v254 = vpop.f32.mrf.mxu0
    %v255 = vadd.f32 0.0, %v254
    %v256 = vpop.f32.mrf.mxu0
    %v257 = vadd.f32 0.0, %v256
    %258 = vmatmul.bf16.gmra.mxu0 %v158
    %v259 = vpop.f32.mrf.mxu0
    %v260 = vadd.f32 0.0, %v259
    %v261 = vpop.f32.mrf.mxu0
    %v262 = vadd.f32 0.0, %v261
    %263 = vdwg.mxu0
    %v264 = vpack.c.bf16 %v227, %v225
    %v265 = vpack.c.bf16 %v232, %v230
    %v266 = vpack.c.bf16 %v237, %v235
    %v267 = vpack.c.bf16 %v242, %v240
    %v268 = vpack.c.bf16 %v247, %v245
    %v269 = vpack.c.bf16 %v252, %v250
    %v270 = vpack.c.bf16 %v257, %v255
    %v271 = vpack.c.bf16 %v262, %v260
    %v272 = vld [vmem:[#allocation2] sm:$0xf]
    %v273 = vld [vmem:[#allocation2 + $0x4] sm:$0xf]
    %v274 = vld [vmem:[#allocation2 + $0x8] sm:$0xf]
    %v275 = vld [vmem:[#allocation2 + $0xc] sm:$0xf]
    %v276 = vld [vmem:[#allocation2 + $0x10] sm:$0xf]
    %v277 = vld [vmem:[#allocation2 + $0x14] sm:$0xf]
    %v278 = vld [vmem:[#allocation2 + $0x18] sm:$0xf]
    %v279 = vld [vmem:[#allocation2 + $0x1c] sm:$0xf]
    %v280 = vld [vmem:[#allocation2 + $0x20] sm:$0xf]
    %v281 = vld [vmem:[#allocation2 + $0x24] sm:$0xf]
    %v282 = vld [vmem:[#allocation2 + $0x28] sm:$0xf]
    %v283 = vld [vmem:[#allocation2 + $0x2c] sm:$0xf]
    %v284 = vld [vmem:[#allocation2 + $0x30] sm:$0xf]
    %v285 = vld [vmem:[#allocation2 + $0x34] sm:$0xf]
    %v286 = vld [vmem:[#allocation2 + $0x38] sm:$0xf]
    %v287 = vld [vmem:[#allocation2 + $0x3c] sm:$0xf]
    %v288 = vld [vmem:[%s3] sm:$0x1]
    %v290 = vperm.slane %v288, 0
    %v308 = vunpack.c.l.b16 %v272
    %v309 = vunpack.c.l.b16 %v273
    %v310 = vunpack.c.l.b16 %v274
    %v311 = vunpack.c.l.b16 %v275
    %v312 = vunpack.c.l.b16 %v276
    %v313 = vunpack.c.l.b16 %v277
    %v314 = vunpack.c.l.b16 %v278
    %v315 = vunpack.c.l.b16 %v279
    %v316 = vunpack.c.l.b16 %v280
    %v317 = vunpack.c.l.b16 %v281
    %v318 = vunpack.c.l.b16 %v282
    %v319 = vunpack.c.l.b16 %v283
    %v320 = vunpack.c.l.b16 %v284
    %v321 = vunpack.c.l.b16 %v285
    %v322 = vunpack.c.l.b16 %v286
    %v323 = vunpack.c.l.b16 %v287
    %v324 = vpack.c.b16 %v309, %v308
    %v325 = vpack.c.b16 %v311, %v310
    %v326 = vpack.c.b16 %v313, %v312
    %v327 = vpack.c.b16 %v315, %v314
    %v328 = vpack.c.b16 %v317, %v316
    %v329 = vpack.c.b16 %v319, %v318
    %v330 = vpack.c.b16 %v321, %v320
    %v331 = vpack.c.b16 %v323, %v322
    %340 = vmatpush.bf16.msra.mxu0 %v271
    %341 = vmatpush.bf16.msra.mxu0 %v270
    %342 = vmatpush.bf16.msra.mxu0 %v269
    %343 = vmatpush.bf16.msra.mxu0 %v268
    %344 = vmatpush.bf16.msra.mxu0 %v267
    %345 = vmatpush.bf16.msra.mxu0 %v266
    %346 = vmatpush.bf16.msra.mxu0 %v265
    %347 = vmatpush.bf16.msra.mxu0 %v264
    %348 = vmatmul.bf16.gmra.mxu0 %v324
    %v349 = vpop.f32.mrf.mxu0
    %v350 = vadd.f32 %v290, %v349
    %v351 = vpop.f32.mrf.mxu0
    %v352 = vadd.f32 %v290, %v351
    %353 = vmatmul.bf16.gmra.mxu0 %v325
    %v354 = vpop.f32.mrf.mxu0
    %v355 = vadd.f32 %v290, %v354
    %v356 = vpop.f32.mrf.mxu0
    %v357 = vadd.f32 %v290, %v356
    %358 = vmatmul.bf16.gmra.mxu0 %v326
    %v359 = vpop.f32.mrf.mxu0
    %v360 = vadd.f32 %v290, %v359
    %v361 = vpop.f32.mrf.mxu0
    %v362 = vadd.f32 %v290, %v361
    %363 = vmatmul.bf16.gmra.mxu0 %v327
    %v364 = vpop.f32.mrf.mxu0
    %v365 = vadd.f32 %v290, %v364
    %v366 = vpop.f32.mrf.mxu0
    %v367 = vadd.f32 %v290, %v366
    %368 = vmatmul.bf16.gmra.mxu0 %v328
    %v369 = vpop.f32.mrf.mxu0
    %v370 = vadd.f32 %v290, %v369
    %v371 = vpop.f32.mrf.mxu0
    %v372 = vadd.f32 %v290, %v371
    %373 = vmatmul.bf16.gmra.mxu0 %v329
    %v374 = vpop.f32.mrf.mxu0
    %v375 = vadd.f32 %v290, %v374
    %v376 = vpop.f32.mrf.mxu0
    %v377 = vadd.f32 %v290, %v376
    %378 = vmatmul.bf16.gmra.mxu0 %v330
    %v379 = vpop.f32.mrf.mxu0
    %v380 = vadd.f32 %v290, %v379
    %v381 = vpop.f32.mrf.mxu0
    %v382 = vadd.f32 %v290, %v381
    %383 = vmatmul.bf16.gmra.mxu0 %v331
    %v384 = vpop.f32.mrf.mxu0
    %v385 = vadd.f32 %v290, %v384
    %v386 = vpop.f32.mrf.mxu0
    %v387 = vadd.f32 %v290, %v386
    %388 = vdwg.mxu0
    %v389 = vmax.f32 %v350, 0.0
    %v390 = vmax.f32 %v352, 0.0
    %v391 = vmax.f32 %v355, 0.0
    %v392 = vmax.f32 %v357, 0.0
    %v393 = vmax.f32 %v360, 0.0
    %v394 = vmax.f32 %v362, 0.0
    %v395 = vmax.f32 %v365, 0.0
    %v396 = vmax.f32 %v367, 0.0
    %v397 = vmax.f32 %v370, 0.0
    %v398 = vmax.f32 %v372, 0.0
    %v399 = vmax.f32 %v375, 0.0
    %v400 = vmax.f32 %v377, 0.0
    %v401 = vmax.f32 %v380, 0.0
    %v402 = vmax.f32 %v382, 0.0
    %v403 = vmax.f32 %v385, 0.0
    %v404 = vmax.f32 %v387, 0.0
    %v405 = vpack.c.bf16 %v390, %v389
    %v406 = vpack.c.bf16 %v392, %v391
    %v407 = vpack.c.bf16 %v394, %v393
    %v408 = vpack.c.bf16 %v396, %v395
    %v409 = vpack.c.bf16 %v398, %v397
    %v410 = vpack.c.bf16 %v400, %v399
    %v411 = vpack.c.bf16 %v402, %v401
    %v412 = vpack.c.bf16 %v404, %v403
    %v413 = vld [vmem:[#allocation8] sm:$0xf]
    %v414 = vld [vmem:[#allocation8 + $0x4] sm:$0xf]
    %v415 = vld [vmem:[#allocation8 + $0x8] sm:$0xf]
    %v416 = vld [vmem:[#allocation8 + $0xc] sm:$0xf]
    %v417 = vld [vmem:[#allocation8 + $0x10] sm:$0xf]
    %v418 = vld [vmem:[#allocation8 + $0x14] sm:$0xf]
    %v419 = vld [vmem:[#allocation8 + $0x18] sm:$0xf]
    %v420 = vld [vmem:[#allocation8 + $0x1c] sm:$0xf]
    %v421 = vld [vmem:[#allocation8 + $0x20] sm:$0xf]
    %v422 = vld [vmem:[#allocation8 + $0x24] sm:$0xf]
    %v423 = vld [vmem:[#allocation8 + $0x28] sm:$0xf]
    %v424 = vld [vmem:[#allocation8 + $0x2c] sm:$0xf]
    %v425 = vld [vmem:[#allocation8 + $0x30] sm:$0xf]
    %v426 = vld [vmem:[#allocation8 + $0x34] sm:$0xf]
    %v427 = vld [vmem:[#allocation8 + $0x38] sm:$0xf]
    %v428 = vld [vmem:[#allocation8 + $0x3c] sm:$0xf]
    %v445 = vunpack.c.l.b16 %v413
    %v446 = vunpack.c.l.b16 %v414
    %v447 = vunpack.c.l.b16 %v415
    %v448 = vunpack.c.l.b16 %v416
    %v449 = vunpack.c.l.b16 %v417
    %v450 = vunpack.c.l.b16 %v418
    %v451 = vunpack.c.l.b16 %v419
    %v452 = vunpack.c.l.b16 %v420
    %v453 = vunpack.c.l.b16 %v421
    %v454 = vunpack.c.l.b16 %v422
    %v455 = vunpack.c.l.b16 %v423
    %v456 = vunpack.c.l.b16 %v424
    %v457 = vunpack.c.l.b16 %v425
    %v458 = vunpack.c.l.b16 %v426
    %v459 = vunpack.c.l.b16 %v427
    %v460 = vunpack.c.l.b16 %v428
    %v461 = vpack.c.b16 %v446, %v445
    %v462 = vpack.c.b16 %v448, %v447
    %v463 = vpack.c.b16 %v450, %v449
    %v464 = vpack.c.b16 %v452, %v451
    %v465 = vpack.c.b16 %v454, %v453
    %v466 = vpack.c.b16 %v456, %v455
    %v467 = vpack.c.b16 %v458, %v457
    %v468 = vpack.c.b16 %v460, %v459
    %477 = vmatpush.bf16.msra.mxu0 %v468
    %478 = vmatpush.bf16.msra.mxu0 %v467
    %479 = vmatpush.bf16.msra.mxu0 %v466
    %480 = vmatpush.bf16.msra.mxu0 %v465
    %481 = vmatpush.bf16.msra.mxu0 %v464
    %482 = vmatpush.bf16.msra.mxu0 %v463
    %483 = vmatpush.bf16.msra.mxu0 %v462
    %484 = vmatpush.bf16.msra.mxu0 %v461
    %485 = vmatmul.bf16.gmra.mxu0 %v405
    %v486 = vpop.f32.mrf.mxu0
    %v487 = vadd.f32 0.0, %v486
    %v488 = vpop.f32.mrf.mxu0
    %v489 = vadd.f32 0.0, %v488
    %490 = vmatmul.bf16.gmra.mxu0 %v406
    %v491 = vpop.f32.mrf.mxu0
    %v492 = vadd.f32 0.0, %v491
    %v493 = vpop.f32.mrf.mxu0
    %v494 = vadd.f32 0.0, %v493
    %495 = vmatmul.bf16.gmra.mxu0 %v407
    %v496 = vpop.f32.mrf.mxu0
    %v497 = vadd.f32 0.0, %v496
    %v498 = vpop.f32.mrf.mxu0
    %v499 = vadd.f32 0.0, %v498
    %500 = vmatmul.bf16.gmra.mxu0 %v408
    %v501 = vpop.f32.mrf.mxu0
    %v502 = vadd.f32 0.0, %v501
    %v503 = vpop.f32.mrf.mxu0
    %v504 = vadd.f32 0.0, %v503
    %505 = vmatmul.bf16.gmra.mxu0 %v409
    %v506 = vpop.f32.mrf.mxu0
    %v507 = vadd.f32 0.0, %v506
    %v508 = vpop.f32.mrf.mxu0
    %v509 = vadd.f32 0.0, %v508
    %510 = vmatmul.bf16.gmra.mxu0 %v410
    %v511 = vpop.f32.mrf.mxu0
    %v512 = vadd.f32 0.0, %v511
    %v513 = vpop.f32.mrf.mxu0
    %v514 = vadd.f32 0.0, %v513
    %515 = vmatmul.bf16.gmra.mxu0 %v411
    %v516 = vpop.f32.mrf.mxu0
    %v517 = vadd.f32 0.0, %v516
    %v518 = vpop.f32.mrf.mxu0
    %v519 = vadd.f32 0.0, %v518
    %520 = vmatmul.bf16.gmra.mxu0 %v412
    %v521 = vpop.f32.mrf.mxu0
    %v522 = vadd.f32 0.0, %v521
    %v523 = vpop.f32.mrf.mxu0
    %v524 = vadd.f32 0.0, %v523
    %525 = vdwg.mxu0
    %v526 = vpack.c.bf16 %v489, %v487
    %v527 = vpack.c.bf16 %v494, %v492
    %v528 = vpack.c.bf16 %v499, %v497
    %v529 = vpack.c.bf16 %v504, %v502
    %v530 = vpack.c.bf16 %v509, %v507
    %v531 = vpack.c.bf16 %v514, %v512
    %v532 = vpack.c.bf16 %v519, %v517
    %v533 = vpack.c.bf16 %v524, %v522
    %v534 = vld [vmem:[%s5] sm:$0x1]
    %v536 = vperm.slane %v534, 0
    %538 = vmatpush.bf16.msra.mxu0 %v533
    %539 = vmatpush.bf16.msra.mxu0 %v532
    %540 = vmatpush.bf16.msra.mxu0 %v531
    %541 = vmatpush.bf16.msra.mxu0 %v530
    %542 = vmatpush.bf16.msra.mxu0 %v529
    %543 = vmatpush.bf16.msra.mxu0 %v528
    %544 = vmatpush.bf16.msra.mxu0 %v527
    %545 = vmatpush.bf16.msra.mxu0 %v526
    %546 = vmatmul.bf16.gmra.mxu0 %v324
    %v547 = vpop.f32.mrf.mxu0
    %v548 = vadd.f32 %v536, %v547
    %v549 = vpop.f32.mrf.mxu0
    %v550 = vadd.f32 %v536, %v549
    %551 = vmatmul.bf16.gmra.mxu0 %v325
    %v552 = vpop.f32.mrf.mxu0
    %v553 = vadd.f32 %v536, %v552
    %v554 = vpop.f32.mrf.mxu0
    %v555 = vadd.f32 %v536, %v554
    %556 = vmatmul.bf16.gmra.mxu0 %v326
    %v557 = vpop.f32.mrf.mxu0
    %v558 = vadd.f32 %v536, %v557
    %v559 = vpop.f32.mrf.mxu0
    %v560 = vadd.f32 %v536, %v559
    %561 = vmatmul.bf16.gmra.mxu0 %v327
    %v562 = vpop.f32.mrf.mxu0
    %v563 = vadd.f32 %v536, %v562
    %v564 = vpop.f32.mrf.mxu0
    %v565 = vadd.f32 %v536, %v564
    %566 = vmatmul.bf16.gmra.mxu0 %v328
    %v567 = vpop.f32.mrf.mxu0
    %v568 = vadd.f32 %v536, %v567
    %v569 = vpop.f32.mrf.mxu0
    %v570 = vadd.f32 %v536, %v569
    %571 = vmatmul.bf16.gmra.mxu0 %v329
    %v572 = vpop.f32.mrf.mxu0
    %v573 = vadd.f32 %v536, %v572
    %v574 = vpop.f32.mrf.mxu0
    %v575 = vadd.f32 %v536, %v574
    %576 = vmatmul.bf16.gmra.mxu0 %v330
    %v577 = vpop.f32.mrf.mxu0
    %v578 = vadd.f32 %v536, %v577
    %v579 = vpop.f32.mrf.mxu0
    %v580 = vadd.f32 %v536, %v579
    %581 = vmatmul.bf16.gmra.mxu0 %v331
    %v582 = vpop.f32.mrf.mxu0
    %v583 = vadd.f32 %v536, %v582
    %v584 = vpop.f32.mrf.mxu0
    %v585 = vadd.f32 %v536, %v584
    %586 = vdwg.mxu0
    %v587 = vlaneseq
    %v588 = vand.u32 %v587, 127
    %vm589 = vcmp.lt.s32.totalorder %v588, 8
    %vm590 = vcmp.ge.s32.totalorder %v588, 64
    %vm591 = vcmp.lt.s32.totalorder %v588, 72
    %vm592 = vmand %vm590, %vm591
    %vm593 = vmor %vm589, %vm592
    %v594 = vsel %vm593, %v548, -1e+30
    %v595 = vsel %vm593, %v550, -1e+30
    %v596 = vsel %vm593, %v553, -1e+30
    %v597 = vsel %vm593, %v555, -1e+30
    %v598 = vsel %vm593, %v558, -1e+30
    %v599 = vsel %vm593, %v560, -1e+30
    %v600 = vsel %vm593, %v563, -1e+30
    %v601 = vsel %vm593, %v565, -1e+30
    %v602 = vsel %vm593, %v568, -1e+30
    %v603 = vsel %vm593, %v570, -1e+30
    %v604 = vsel %vm593, %v573, -1e+30
    %v605 = vsel %vm593, %v575, -1e+30
    %v606 = vsel %vm593, %v578, -1e+30
    %v607 = vsel %vm593, %v580, -1e+30
    %v608 = vsel %vm593, %v583, -1e+30
    %v609 = vsel %vm593, %v585, -1e+30
    %v610 = vsel %vm589, %v594, -1e+30
    %v611 = vsel %vm589, %v595, -1e+30
    %v612 = vsel %vm589, %v596, -1e+30
    %v613 = vsel %vm589, %v597, -1e+30
    %v614 = vsel %vm589, %v598, -1e+30
    %v615 = vsel %vm589, %v599, -1e+30
    %v616 = vsel %vm589, %v600, -1e+30
    %v617 = vsel %vm589, %v601, -1e+30
    %v618 = vsel %vm589, %v602, -1e+30
    %v619 = vsel %vm589, %v603, -1e+30
    %v620 = vsel %vm589, %v604, -1e+30
    %v621 = vsel %vm589, %v605, -1e+30
    %v622 = vsel %vm589, %v606, -1e+30
    %v623 = vsel %vm589, %v607, -1e+30
    %v624 = vsel %vm589, %v608, -1e+30
    %v625 = vsel %vm589, %v609, -1e+30
    %626 = vmax.xlane.f32.xlu0 %v610
    %v627 = vpop.xlane.xlu0 %626
    %628 = vmax.xlane.f32.xlu0 %v611
    %v629 = vpop.xlane.xlu0 %628
    %630 = vmax.xlane.f32.xlu0 %v612
    %v631 = vpop.xlane.xlu0 %630
    %632 = vmax.xlane.f32.xlu0 %v613
    %v633 = vpop.xlane.xlu0 %632
    %634 = vmax.xlane.f32.xlu0 %v614
    %v635 = vpop.xlane.xlu0 %634
    %636 = vmax.xlane.f32.xlu0 %v615
    %v637 = vpop.xlane.xlu0 %636
    %638 = vmax.xlane.f32.xlu0 %v616
    %v639 = vpop.xlane.xlu0 %638
    %640 = vmax.xlane.f32.xlu0 %v617
    %v641 = vpop.xlane.xlu0 %640
    %642 = vmax.xlane.f32.xlu0 %v618
    %v643 = vpop.xlane.xlu0 %642
    %644 = vmax.xlane.f32.xlu0 %v619
    %v645 = vpop.xlane.xlu0 %644
    %646 = vmax.xlane.f32.xlu0 %v620
    %v647 = vpop.xlane.xlu0 %646
    %648 = vmax.xlane.f32.xlu0 %v621
    %v649 = vpop.xlane.xlu0 %648
    %650 = vmax.xlane.f32.xlu0 %v622
    %v651 = vpop.xlane.xlu0 %650
    %652 = vmax.xlane.f32.xlu0 %v623
    %v653 = vpop.xlane.xlu0 %652
    %654 = vmax.xlane.f32.xlu0 %v624
    %v655 = vpop.xlane.xlu0 %654
    %656 = vmax.xlane.f32.xlu0 %v625
    %v657 = vpop.xlane.xlu0 %656
    %v658 = vsel %vm592, %v594, -1e+30
    %v659 = vsel %vm592, %v595, -1e+30
    %v660 = vsel %vm592, %v596, -1e+30
    %v661 = vsel %vm592, %v597, -1e+30
    %v662 = vsel %vm592, %v598, -1e+30
    %v663 = vsel %vm592, %v599, -1e+30
    %v664 = vsel %vm592, %v600, -1e+30
    %v665 = vsel %vm592, %v601, -1e+30
    %v666 = vsel %vm592, %v602, -1e+30
    %v667 = vsel %vm592, %v603, -1e+30
    %v668 = vsel %vm592, %v604, -1e+30
    %v669 = vsel %vm592, %v605, -1e+30
    %v670 = vsel %vm592, %v606, -1e+30
    %v671 = vsel %vm592, %v607, -1e+30
    %v672 = vsel %vm592, %v608, -1e+30
    %v673 = vsel %vm592, %v609, -1e+30
    %674 = vmax.xlane.f32.xlu0 %v658
    %v675 = vpop.xlane.xlu0 %674
    %676 = vmax.xlane.f32.xlu0 %v659
    %v677 = vpop.xlane.xlu0 %676
    %678 = vmax.xlane.f32.xlu0 %v660
    %v679 = vpop.xlane.xlu0 %678
    %680 = vmax.xlane.f32.xlu0 %v661
    %v681 = vpop.xlane.xlu0 %680
    %682 = vmax.xlane.f32.xlu0 %v662
    %v683 = vpop.xlane.xlu0 %682
    %684 = vmax.xlane.f32.xlu0 %v663
    %v685 = vpop.xlane.xlu0 %684
    %686 = vmax.xlane.f32.xlu0 %v664
    %v687 = vpop.xlane.xlu0 %686
    %688 = vmax.xlane.f32.xlu0 %v665
    %v689 = vpop.xlane.xlu0 %688
    %690 = vmax.xlane.f32.xlu0 %v666
    %v691 = vpop.xlane.xlu0 %690
    %692 = vmax.xlane.f32.xlu0 %v667
    %v693 = vpop.xlane.xlu0 %692
    %694 = vmax.xlane.f32.xlu0 %v668
    %v695 = vpop.xlane.xlu0 %694
    %696 = vmax.xlane.f32.xlu0 %v669
    %v697 = vpop.xlane.xlu0 %696
    %698 = vmax.xlane.f32.xlu0 %v670
    %v699 = vpop.xlane.xlu0 %698
    %700 = vmax.xlane.f32.xlu0 %v671
    %v701 = vpop.xlane.xlu0 %700
    %702 = vmax.xlane.f32.xlu0 %v672
    %v703 = vpop.xlane.xlu0 %702
    %704 = vmax.xlane.f32.xlu0 %v673
    %v705 = vpop.xlane.xlu0 %704
    %vm706 = vcmp.lt.s32.totalorder %v588, 64
    %v707 = vsel %vm706, %v627, %v675
    %v708 = vsel %vm706, %v629, %v677
    %v709 = vsel %vm706, %v631, %v679
    %v710 = vsel %vm706, %v633, %v681
    %v711 = vsel %vm706, %v635, %v683
    %v712 = vsel %vm706, %v637, %v685
    %v713 = vsel %vm706, %v639, %v687
    %v714 = vsel %vm706, %v641, %v689
    %v715 = vsel %vm706, %v643, %v691
    %v716 = vsel %vm706, %v645, %v693
    %v717 = vsel %vm706, %v647, %v695
    %v718 = vsel %vm706, %v649, %v697
    %v719 = vsel %vm706, %v651, %v699
    %v720 = vsel %vm706, %v653, %v701
    %v721 = vsel %vm706, %v655, %v703
    %v722 = vsel %vm706, %v657, %v705
    %v723 = vsub.f32 %v594, %v707
    %v724 = vsub.f32 %v595, %v708
    %v725 = vsub.f32 %v596, %v709
    %v726 = vsub.f32 %v597, %v710
    %v727 = vsub.f32 %v598, %v711
    %v728 = vsub.f32 %v599, %v712
    %v729 = vsub.f32 %v600, %v713
    %v730 = vsub.f32 %v601, %v714
    %v731 = vsub.f32 %v602, %v715
    %v732 = vsub.f32 %v603, %v716
    %v733 = vsub.f32 %v604, %v717
    %v734 = vsub.f32 %v605, %v718
    %v735 = vsub.f32 %v606, %v719
    %v736 = vsub.f32 %v607, %v720
    %v737 = vsub.f32 %v608, %v721
    %v738 = vsub.f32 %v609, %v722
    %v739 = vmul.f32 %v723, 1.442695
    %v740 = vpow.pop %v739
    %v741 = vmul.f32 %v724, 1.442695
    %v742 = vpow.pop %v741
    %v743 = vmul.f32 %v725, 1.442695
    %v744 = vpow.pop %v743
    %v745 = vmul.f32 %v726, 1.442695
    %v746 = vpow.pop %v745
    %v747 = vmul.f32 %v727, 1.442695
    %v748 = vpow.pop %v747
    %v749 = vmul.f32 %v728, 1.442695
    %v750 = vpow.pop %v749
    %v751 = vmul.f32 %v729, 1.442695
    %v752 = vpow.pop %v751
    %v753 = vmul.f32 %v730, 1.442695
    %v754 = vpow.pop %v753
    %v755 = vmul.f32 %v731, 1.442695
    %v756 = vpow.pop %v755
    %v757 = vmul.f32 %v732, 1.442695
    %v758 = vpow.pop %v757
    %v759 = vmul.f32 %v733, 1.442695
    %v760 = vpow.pop %v759
    %v761 = vmul.f32 %v734, 1.442695
    %v762 = vpow.pop %v761
    %v763 = vmul.f32 %v735, 1.442695
    %v764 = vpow.pop %v763
    %v765 = vmul.f32 %v736, 1.442695
    %v766 = vpow.pop %v765
    %v767 = vmul.f32 %v737, 1.442695
    %v768 = vpow.pop %v767
    %v769 = vmul.f32 %v738, 1.442695
    %v770 = vpow.pop %v769
    %v771 = vsel %vm589, %v740, 0.0
    %v772 = vsel %vm589, %v742, 0.0
    %v773 = vsel %vm589, %v744, 0.0
    %v774 = vsel %vm589, %v746, 0.0
    %v775 = vsel %vm589, %v748, 0.0
    %v776 = vsel %vm589, %v750, 0.0
    %v777 = vsel %vm589, %v752, 0.0
    %v778 = vsel %vm589, %v754, 0.0
    %v779 = vsel %vm589, %v756, 0.0
    %v780 = vsel %vm589, %v758, 0.0
    %v781 = vsel %vm589, %v760, 0.0
    %v782 = vsel %vm589, %v762, 0.0
    %v783 = vsel %vm589, %v764, 0.0
    %v784 = vsel %vm589, %v766, 0.0
    %v785 = vsel %vm589, %v768, 0.0
    %v786 = vsel %vm589, %v770, 0.0
    %787 = vadd.xlane.f32.xlu0 %v771
    %v788 = vpop.xlane.xlu0 %787
    %789 = vadd.xlane.f32.xlu0 %v772
    %v790 = vpop.xlane.xlu0 %789
    %791 = vadd.xlane.f32.xlu0 %v773
    %v792 = vpop.xlane.xlu0 %791
    %793 = vadd.xlane.f32.xlu0 %v774
    %v794 = vpop.xlane.xlu0 %793
    %795 = vadd.xlane.f32.xlu0 %v775
    %v796 = vpop.xlane.xlu0 %795
    %797 = vadd.xlane.f32.xlu0 %v776
    %v798 = vpop.xlane.xlu0 %797
    %799 = vadd.xlane.f32.xlu0 %v777
    %v800 = vpop.xlane.xlu0 %799
    %801 = vadd.xlane.f32.xlu0 %v778
    %v802 = vpop.xlane.xlu0 %801
    %803 = vadd.xlane.f32.xlu0 %v779
    %v804 = vpop.xlane.xlu0 %803
    %805 = vadd.xlane.f32.xlu0 %v780
    %v806 = vpop.xlane.xlu0 %805
    %807 = vadd.xlane.f32.xlu0 %v781
    %v808 = vpop.xlane.xlu0 %807
    %809 = vadd.xlane.f32.xlu0 %v782
    %v810 = vpop.xlane.xlu0 %809
    %811 = vadd.xlane.f32.xlu0 %v783
    %v812 = vpop.xlane.xlu0 %811
    %813 = vadd.xlane.f32.xlu0 %v784
    %v814 = vpop.xlane.xlu0 %813
    %815 = vadd.xlane.f32.xlu0 %v785
    %v816 = vpop.xlane.xlu0 %815
    %817 = vadd.xlane.f32.xlu0 %v786
    %v818 = vpop.xlane.xlu0 %817
    %v819 = vsel %vm592, %v740, 0.0
    %v820 = vsel %vm592, %v742, 0.0
    %v821 = vsel %vm592, %v744, 0.0
    %v822 = vsel %vm592, %v746, 0.0
    %v823 = vsel %vm592, %v748, 0.0
    %v824 = vsel %vm592, %v750, 0.0
    %v825 = vsel %vm592, %v752, 0.0
    %v826 = vsel %vm592, %v754, 0.0
    %v827 = vsel %vm592, %v756, 0.0
    %v828 = vsel %vm592, %v758, 0.0
    %v829 = vsel %vm592, %v760, 0.0
    %v830 = vsel %vm592, %v762, 0.0
    %v831 = vsel %vm592, %v764, 0.0
    %v832 = vsel %vm592, %v766, 0.0
    %v833 = vsel %vm592, %v768, 0.0
    %v834 = vsel %vm592, %v770, 0.0
    %835 = vadd.xlane.f32.xlu0 %v819
    %v836 = vpop.xlane.xlu0 %835
    %837 = vadd.xlane.f32.xlu0 %v820
    %v838 = vpop.xlane.xlu0 %837
    %839 = vadd.xlane.f32.xlu0 %v821
    %v840 = vpop.xlane.xlu0 %839
    %841 = vadd.xlane.f32.xlu0 %v822
    %v842 = vpop.xlane.xlu0 %841
    %843 = vadd.xlane.f32.xlu0 %v823
    %v844 = vpop.xlane.xlu0 %843
    %845 = vadd.xlane.f32.xlu0 %v824
    %v846 = vpop.xlane.xlu0 %845
    %847 = vadd.xlane.f32.xlu0 %v825
    %v848 = vpop.xlane.xlu0 %847
    %849 = vadd.xlane.f32.xlu0 %v826
    %v850 = vpop.xlane.xlu0 %849
    %851 = vadd.xlane.f32.xlu0 %v827
    %v852 = vpop.xlane.xlu0 %851
    %853 = vadd.xlane.f32.xlu0 %v828
    %v854 = vpop.xlane.xlu0 %853
    %855 = vadd.xlane.f32.xlu0 %v829
    %v856 = vpop.xlane.xlu0 %855
    %857 = vadd.xlane.f32.xlu0 %v830
    %v858 = vpop.xlane.xlu0 %857
    %859 = vadd.xlane.f32.xlu0 %v831
    %v860 = vpop.xlane.xlu0 %859
    %861 = vadd.xlane.f32.xlu0 %v832
    %v862 = vpop.xlane.xlu0 %861
    %863 = vadd.xlane.f32.xlu0 %v833
    %v864 = vpop.xlane.xlu0 %863
    %865 = vadd.xlane.f32.xlu0 %v834
    %v866 = vpop.xlane.xlu0 %865
    %v867 = vsel %vm706, %v788, %v836
    %v868 = vsel %vm706, %v790, %v838
    %v869 = vsel %vm706, %v792, %v840
    %v870 = vsel %vm706, %v794, %v842
    %v871 = vsel %vm706, %v796, %v844
    %v872 = vsel %vm706, %v798, %v846
    %v873 = vsel %vm706, %v800, %v848
    %v874 = vsel %vm706, %v802, %v850
    %v875 = vsel %vm706, %v804, %v852
    %v876 = vsel %vm706, %v806, %v854
    %v877 = vsel %vm706, %v808, %v856
    %v878 = vsel %vm706, %v810, %v858
    %v879 = vsel %vm706, %v812, %v860
    %v880 = vsel %vm706, %v814, %v862
    %v881 = vsel %vm706, %v816, %v864
    %v882 = vsel %vm706, %v818, %v866
    %v883 = vsub.f32 %v548, %v707
    %v884 = vsub.f32 %v550, %v708
    %v885 = vsub.f32 %v553, %v709
    %v886 = vsub.f32 %v555, %v710
    %v887 = vsub.f32 %v558, %v711
    %v888 = vsub.f32 %v560, %v712
    %v889 = vsub.f32 %v563, %v713
    %v890 = vsub.f32 %v565, %v714
    %v891 = vsub.f32 %v568, %v715
    %v892 = vsub.f32 %v570, %v716
    %v893 = vsub.f32 %v573, %v717
    %v894 = vsub.f32 %v575, %v718
    %v895 = vsub.f32 %v578, %v719
    %v896 = vsub.f32 %v580, %v720
    %v897 = vsub.f32 %v583, %v721
    %v898 = vsub.f32 %v585, %v722
    %v899 = vlog2.pop %v867
    %v900 = vmul.f32 %v899, 0.6931472
    %v901 = vlog2.pop %v868
    %v902 = vmul.f32 %v901, 0.6931472
    %v903 = vlog2.pop %v869
    %v904 = vmul.f32 %v903, 0.6931472
    %v905 = vlog2.pop %v870
    %v906 = vmul.f32 %v905, 0.6931472
    %v907 = vlog2.pop %v871
    %v908 = vmul.f32 %v907, 0.6931472
    %v909 = vlog2.pop %v872
    %v910 = vmul.f32 %v909, 0.6931472
    %v911 = vlog2.pop %v873
    %v912 = vmul.f32 %v911, 0.6931472
    %v913 = vlog2.pop %v874
    %v914 = vmul.f32 %v913, 0.6931472
    %v915 = vlog2.pop %v875
    %v916 = vmul.f32 %v915, 0.6931472
    %v917 = vlog2.pop %v876
    %v918 = vmul.f32 %v917, 0.6931472
    %v919 = vlog2.pop %v877
    %v920 = vmul.f32 %v919, 0.6931472
    %v921 = vlog2.pop %v878
    %v922 = vmul.f32 %v921, 0.6931472
    %v923 = vlog2.pop %v879
    %v924 = vmul.f32 %v923, 0.6931472
    %v925 = vlog2.pop %v880
    %v926 = vmul.f32 %v925, 0.6931472
    %v927 = vlog2.pop %v881
    %v928 = vmul.f32 %v927, 0.6931472
    %v929 = vlog2.pop %v882
    %v930 = vmul.f32 %v929, 0.6931472
    %v931 = vsub.f32 %v883, %v900
    %v932 = vsub.f32 %v884, %v902
    %v933 = vsub.f32 %v885, %v904
    %v934 = vsub.f32 %v886, %v906
    %v935 = vsub.f32 %v887, %v908
    %v936 = vsub.f32 %v888, %v910
    %v937 = vsub.f32 %v889, %v912
    %v938 = vsub.f32 %v890, %v914
    %v939 = vsub.f32 %v891, %v916
    %v940 = vsub.f32 %v892, %v918
    %v941 = vsub.f32 %v893, %v920
    %v942 = vsub.f32 %v894, %v922
    %v943 = vsub.f32 %v895, %v924
    %v944 = vsub.f32 %v896, %v926
    %v945 = vsub.f32 %v897, %v928
    %v946 = vsub.f32 %v898, %v930
    %947 = vst [vmem:[#allocation10] sm:$0xff] %v931
    %948 = vst [vmem:[#allocation10 + $0x8] sm:$0xff] %v932
    %949 = vst [vmem:[#allocation10 + $0x10] sm:$0xff] %v933
    %950 = vst [vmem:[#allocation10 + $0x18] sm:$0xff] %v934
    %951 = vst [vmem:[#allocation10 + $0x20] sm:$0xff] %v935
    %952 = vst [vmem:[#allocation10 + $0x28] sm:$0xff] %v936
    %953 = vst [vmem:[#allocation10 + $0x30] sm:$0xff] %v937
    %954 = vst [vmem:[#allocation10 + $0x38] sm:$0xff] %v938
    %955 = vst [vmem:[#allocation10 + $0x40] sm:$0xff] %v939
    %956 = vst [vmem:[#allocation10 + $0x48] sm:$0xff] %v940
    %957 = vst [vmem:[#allocation10 + $0x50] sm:$0xff] %v941
    %958 = vst [vmem:[#allocation10 + $0x58] sm:$0xff] %v942
    %959 = vst [vmem:[#allocation10 + $0x60] sm:$0xff] %v943
    %960 = vst [vmem:[#allocation10 + $0x68] sm:$0xff] %v944
    %961 = vst [vmem:[#allocation10 + $0x70] sm:$0xff] %v945
    %962 = vst [vmem:[#allocation10 + $0x78] sm:$0xff] %v946
    // Predicated region
    $region42: #{tpu_custom_call.1} parent=1 // pred_check
      _
    $region43: #{tpu_custom_call.1} parent=1 // pred_check_branch
      %964 = sbr.rel (0) target = $region45
    $region44: #{tpu_custom_call.1} parent=1 // pred_region
      %966 = vsyncadd [#allocation4], 0
      %s967 = sshll.u32 [#allocation10], 4
      %s968 = int_to_ptr.vmem [resolvable:$true] %s967
      %s969 = sshll.u32 %s6, 4
      %s970 = int_to_ptr.hbm [resolvable:$true] %s969
      %975 = dma.vmem_to_hbm [thread:$0]  %s968, 2048, %s970, [#allocation4], 128, 128, 8
    $region45: #{tpu_custom_call.1} parent=1 // pred_fallthru
      _
    // Predicated region
    $region46: #{tpu_custom_call.1} parent=1 // pred_check
      _
    $region47: #{tpu_custom_call.1} parent=1 // pred_check_branch
      %977 = sbr.rel (0) target = $region49
    $region48: #{tpu_custom_call.1} parent=1 // pred_region
      %979 = dma.done [#allocation4], 2048
    $region49: #{tpu_custom_call.1} parent=1 // pred_fallthru
      _
    %980 = vsyncpa [#allocation3], 1
    %981 = vsyncpa [#allocation6], 1
    %982 = vsyncpa [#allocation9], 1
    %983 = vsyncpa [#allocation4], 1

</llo_original>
